<compile_context>
chip_gen: v7x
topology: tpu7x:2x2x1
jax: 0.10.0
libtpu: 0.0.40
codegen_flags: <defaults>
</compile_context>

<pallas_src>
import jax
import jax.numpy as jnp
from jax import lax
from jax.experimental import pallas as pl
from jax.experimental.pallas import tpu as pltpu


def _pick_hw_tile(hw_pad, max_tile, vmem_budget_bytes, bytes_per_col):
    """Largest multiple-of-128 tile dividing hw_pad, bounded by a VMEM budget
    for the double-buffered streaming blocks."""
    limit = max(128, (vmem_budget_bytes // max(1, 2 * bytes_per_col)) // 128 * 128)
    t = max(128, min(max_tile, limit, hw_pad))
    t -= t % 128
    while hw_pad % t != 0:   # hw_pad is a multiple of 128 -> terminates at 128
        t -= 128
    return t


# ---------------------------------------------------------------------------
# Kernel A: fused spatial-softmax region pooling + phi projection.
# Streams fea/pre over HW tiles exactly once per batch element.
#   f[b, j, c]   = sum_p softmax_p(pre[b, j, :])[p] * fea[b, c, p]   (online softmax)
#   phi[b, m, p] = relu(Wfi[m, :] @ fea[b, :, p] + bfi[m])
# f is stored transposed as (n, k, c) so kernel B consumes it with a
# contracting dot (no in-kernel transposes).
# ---------------------------------------------------------------------------
def _pool_phi_kernel(pre_ref, fea_ref, wfi_ref, bfi_ref,
                     f_ref, phi_ref, m_s, s_s, acc_s):
    t = pl.program_id(1)

    @pl.when(t == 0)
    def _():
        m_s[...] = jnp.full(m_s.shape, -jnp.inf, jnp.float32)
        s_s[...] = jnp.zeros(s_s.shape, jnp.float32)
        acc_s[...] = jnp.zeros(acc_s.shape, jnp.float32)

    x2 = fea_ref[0]                                     # (c, thw)   storage dtype
    p2 = pre_ref[0]                                     # (k, thw)   storage dtype

    # phi = relu(Wfi @ fea + bfi)  -- bf16 operands, f32 accumulation
    phi = jnp.dot(wfi_ref[...], x2, preferred_element_type=jnp.float32)
    phi = phi + bfi_ref[...]
    phi_ref[0] = jnp.maximum(phi, 0.0).astype(phi_ref.dtype)

    # Online softmax over the HW reduction axis (flash-style).
    p2f = p2.astype(jnp.float32)
    m_prev = m_s[...]                                   # (k, 1)
    m_new = jnp.maximum(m_prev, jnp.max(p2f, axis=-1, keepdims=True))
    alpha = jnp.exp(m_prev - m_new)
    e = jnp.exp(p2f - m_new)                            # (k, thw) f32
    s_s[...] = alpha * s_s[...] + jnp.sum(e, axis=-1, keepdims=True)
    acc_s[...] = alpha * acc_s[...] + lax.dot_general(
        e.astype(x2.dtype), x2, (((1,), (1,)), ((), ())),
        preferred_element_type=jnp.float32)             # (k, c)
    m_s[...] = m_new

    @pl.when(t == pl.num_programs(1) - 1)
    def _():
        f_ref[0] = (acc_s[...] *
                    pl.reciprocal(s_s[...], approx=True)).astype(f_ref.dtype)


def _pool_and_phi(pre_r, fea_r, w_fi, b_fi, *, thw):
    n, k, hw = pre_r.shape
    c = fea_r.shape[1]
    mid = w_fi.shape[0]
    n_t = hw // thw
    return pl.pallas_call(
        _pool_phi_kernel,
        out_shape=(jax.ShapeDtypeStruct((n, k, c), jnp.float32),
                   jax.ShapeDtypeStruct((n, mid, hw), fea_r.dtype)),
        grid_spec=pltpu.PrefetchScalarGridSpec(
            num_scalar_prefetch=0,
            grid=(n, n_t),
            in_specs=[
                pl.BlockSpec((1, k, thw), lambda b, t: (b, 0, t)),
                pl.BlockSpec((1, c, thw), lambda b, t: (b, 0, t)),
                pl.BlockSpec((mid, c), lambda b, t: (0, 0)),
                pl.BlockSpec((mid, 1), lambda b, t: (0, 0)),
            ],
            out_specs=[
                pl.BlockSpec((1, k, c), lambda b, t: (b, 0, 0)),
                pl.BlockSpec((1, mid, thw), lambda b, t: (b, 0, t)),
            ],
            scratch_shapes=[
                pltpu.VMEM((k, 1), jnp.float32),
                pltpu.VMEM((k, 1), jnp.float32),
                pltpu.VMEM((k, c), jnp.float32),
            ],
        ),
        compiler_params=pltpu.CompilerParams(
            dimension_semantics=("parallel", "arbitrary")),
    )(pre_r, fea_r, w_fi, b_fi)


# ---------------------------------------------------------------------------
# Kernel B: theta/gama projections (hoisted, once per batch) + pixel-region
# attention + redistribution + final conv1x1+BN+ReLU, fused and streamed over
# HW tiles.
#   f_t = relu(Wt @ f + bt), f_g = relu(Wg @ f + bg)          # (mid, k), t==0 only
#   A   = softmax_k(f_t^T @ phi)                              # (k, thw)
#   x0  = f_g @ A                                             # (mid, thw)
#   out = relu(Wp @ x0 + bp)                                  # (c, thw)
# ---------------------------------------------------------------------------
def _attend_project_kernel(f_ref, phi_ref, wt_ref, bt_ref, wg_ref, bg_ref,
                           wp_ref, bp_ref, o_ref, ft_s, fg_s):
    @pl.when(pl.program_id(1) == 0)
    def _():
        fkc = f_ref[0]                                  # (k, c) f32
        wt = wt_ref[...].astype(jnp.float32)            # (mid, c)
        wg = wg_ref[...].astype(jnp.float32)
        ft = lax.dot_general(wt, fkc, (((1,), (1,)), ((), ())),
                             preferred_element_type=jnp.float32) + bt_ref[...]
        fg = lax.dot_general(wg, fkc, (((1,), (1,)), ((), ())),
                             preferred_element_type=jnp.float32) + bg_ref[...]
        ft_s[...] = jnp.maximum(ft, 0.0)                # (mid, k)
        fg_s[...] = jnp.maximum(fg, 0.0)                # (mid, k)

    phi = phi_ref[0]                                    # (mid, thw)
    cdt = phi.dtype

    logits = lax.dot_general(ft_s[...].astype(cdt), phi,
                             (((0,), (0,)), ((), ())),
                             preferred_element_type=jnp.float32)     # (k, thw)
    mx = jnp.max(logits, axis=0, keepdims=True)
    e = jnp.exp(logits - mx)
    a = e * pl.reciprocal(jnp.sum(e, axis=0, keepdims=True), approx=True)

    x0 = jnp.dot(fg_s[...].astype(cdt), a.astype(cdt),
                 preferred_element_type=jnp.float32)                 # (mid, thw)
    y = jnp.dot(wp_ref[...], x0.astype(cdt),
                preferred_element_type=jnp.float32) + bp_ref[...]    # (c, thw)
    o_ref[0] = jnp.maximum(y, 0.0).astype(o_ref.dtype)


def _attend_project(f_kc, phi, w_t, b_t, w_g, b_g, w_p, b_p, *, thw):
    n, k, c = f_kc.shape
    mid, hw = phi.shape[1], phi.shape[2]
    cout = w_p.shape[0]
    n_t = hw // thw
    return pl.pallas_call(
        _attend_project_kernel,
        out_shape=jax.ShapeDtypeStruct((n, cout, hw), phi.dtype),
        grid_spec=pltpu.PrefetchScalarGridSpec(
            num_scalar_prefetch=0,
            grid=(n, n_t),
            in_specs=[
                pl.BlockSpec((1, k, c), lambda b, t: (b, 0, 0)),
                pl.BlockSpec((1, mid, thw), lambda b, t: (b, 0, t)),
                pl.BlockSpec((mid, c), lambda b, t: (0, 0)),
                pl.BlockSpec((mid, 1), lambda b, t: (0, 0)),
                pl.BlockSpec((mid, c), lambda b, t: (0, 0)),
                pl.BlockSpec((mid, 1), lambda b, t: (0, 0)),
                pl.BlockSpec((cout, mid), lambda b, t: (0, 0)),
                pl.BlockSpec((cout, 1), lambda b, t: (0, 0)),
            ],
            out_specs=pl.BlockSpec((1, cout, thw), lambda b, t: (b, 0, t)),
            scratch_shapes=[
                pltpu.VMEM((mid, k), jnp.float32),
                pltpu.VMEM((mid, k), jnp.float32),
            ],
        ),
        compiler_params=pltpu.CompilerParams(
            # HW axis is "arbitrary": the f_t/f_g scratch is reused across t.
            dimension_semantics=("parallel", "arbitrary")),
    )(f_kc, phi, w_t, b_t, w_g, b_g, w_p, b_p)


# ---------------------------------------------------------------------------
# Wrapper
# ---------------------------------------------------------------------------
def _fold_conv_bn(w_conv, gamma, beta, mean, var, eps=1e-5):
    """Fold Conv2d(1x1, bias=False) + BatchNorm2d(eval) into (W', b')."""
    scale = gamma / jnp.sqrt(var + eps)                 # (cout,)
    w_f = w_conv * scale[:, None]                       # (cout, cin)
    b_f = (beta - mean * scale)[:, None]                # (cout, 1)
    return w_f.astype(jnp.float32), b_f.astype(jnp.float32)


def ocr_forward(fea, pre, params, *, max_hw_tile=2048,
                vmem_budget_bytes=16 << 20):
    """fea: (n, c, h, w); pre: (n, k, h, w). Returns (n, c, h, w)."""
    n, c, h, w = fea.shape
    k = pre.shape[1]
    hw = h * w

    w_fi, b_fi = params["fi"]
    w_t, b_t = params["theta"]
    w_g, b_g = params["gama"]
    w_p, b_p = params["p"]
    mid = w_fi.shape[0]

    fea_r = fea.reshape(n, c, hw)
    pre_r = pre.reshape(n, k, hw)

    # Pad HW to a multiple of 128 so every block is lane-dense (padded pre
    # columns are -inf => zero softmax weight; padded output columns dropped).
    hw_pad = -(-hw // 128) * 128
    if hw_pad != hw:
        pad = hw_pad - hw
        fea_r = jnp.pad(fea_r, ((0, 0), (0, 0), (0, pad)))
        pre_r = jnp.pad(pre_r, ((0, 0), (0, 0), (0, pad)),
                        constant_values=jnp.finfo(pre_r.dtype).min)

    itemsize = jnp.dtype(fea.dtype).itemsize
    bytes_per_col = (k + c + mid) * itemsize            # heaviest streaming kernel
    thw = _pick_hw_tile(hw_pad, max_hw_tile, vmem_budget_bytes, bytes_per_col)

    f_kc, phi = _pool_and_phi(pre_r, fea_r, w_fi, b_fi, thw=thw)   # (n,k,c), (n,mid,hw)
    out = _attend_project(f_kc, phi, w_t, b_t, w_g, b_g, w_p, b_p, thw=thw)
    if hw_pad != hw:
        out = out[:, :, :hw]
    return out.reshape(n, c, h, w)


# ---------------------------------------------------------------------------
# Plain-JAX f32 reference (same eval-mode BN-folded semantics)
# ---------------------------------------------------------------------------
def _ocr_reference(fea, pre, params):
    f32 = jnp.float32
    n, c, h, w = fea.shape
    k = pre.shape[1]
    hw = h * w
    fea_t = fea.astype(f32).reshape(n, c, hw)
    pre_r = pre.astype(f32).reshape(n, k, hw)

    def cbr(x, w_, b_):
        return jax.nn.relu(jnp.einsum("oc,ncl->nol", w_.astype(f32), x)
                           + b_.astype(f32)[None])

    w_fi, b_fi = params["fi"]
    w_t, b_t = params["theta"]
    w_g, b_g = params["gama"]
    w_p, b_p = params["p"]

    M = jax.nn.softmax(pre_r, axis=2)                           # (n, k, hw)
    f = jnp.einsum("nch,nkh->nck", fea_t, M)                    # (n, c, k)
    fea_fi = cbr(fea_t, w_fi, b_fi)                             # (n, mid, hw)
    f_t = cbr(f, w_t, b_t)                                      # (n, mid, k)
    f_g = cbr(f, w_g, b_g)                                      # (n, mid, k)
    A = jnp.einsum("nmp,nmk->npk", fea_fi, f_t)                 # (n, hw, k)
    A = jax.nn.softmax(A, axis=-1)
    x0 = jnp.einsum("nmk,npk->nmp", f_g, A)                     # (n, mid, hw)
    out = cbr(x0, w_p, b_p)                                     # (n, c, hw)
    return out.reshape(n, c, h, w)


if __name__ == "__main__":
    key = jax.random.PRNGKey(0)
    n, c, mid, k, h, w = 2, 32, 16, 8, 16, 16
    keys = jax.random.split(key, 22)

    dtype = jnp.bfloat16   # bf16 operands end-to-end (per perf review)
    fea = jax.random.normal(keys[0], (n, c, h, w), jnp.float32).astype(dtype)
    pre = jax.random.normal(keys[1], (n, k, h, w), jnp.float32).astype(dtype)

    def make_branch(ks, cout, cin):
        w_conv = jax.random.normal(ks[0], (cout, cin), jnp.float32) * (1.0 / (cin ** 0.5))
        gamma = 1.0 + 0.1 * jax.random.normal(ks[1], (cout,), jnp.float32)
        beta = 0.1 * jax.random.normal(ks[2], (cout,), jnp.float32)
        mean = 0.05 * jax.random.normal(ks[3], (cout,), jnp.float32)
        var = 1.0 + 0.1 * jnp.abs(jax.random.normal(ks[4], (cout,), jnp.float32))
        w_f, b_f = _fold_conv_bn(w_conv, gamma, beta, mean, var)
        return w_f.astype(dtype), b_f    # weight in compute dtype, bias f32

    params = {
        "fi": make_branch(keys[2:7], mid, c),
        "theta": make_branch(keys[7:12], mid, c),
        "gama": make_branch(keys[12:17], mid, c),
        "p": make_branch(keys[17:22], c, mid),
    }

    out = jax.block_until_ready(ocr_forward(fea, pre, params))
    ref = _ocr_reference(fea, pre, params)

    assert out.shape == (n, c, h, w)
    err = float(jnp.max(jnp.abs(out.astype(jnp.float32) - ref)))
    assert err < 5e-2, f"mismatch vs reference: max abs err {err}"

    print("KERNEL_OK")
</pallas_src>

<mosaic_0001>
module attributes {stable_mosaic.version = 11 : i64} {
  func.func @_pool_phi_kernel(%arg0: i32, %arg1: i32, %arg2: memref<1x8x256xbf16, #tpu.memory_space<vmem>>, %arg3: memref<1x32x256xbf16, #tpu.memory_space<vmem>>, %arg4: memref<16x32xbf16, #tpu.memory_space<vmem>>, %arg5: memref<16x1xf32, #tpu.memory_space<vmem>>, %arg6: memref<1x8x32xf32, #tpu.memory_space<vmem>>, %arg7: memref<1x16x256xbf16, #tpu.memory_space<vmem>>, %arg8: memref<8x1xf32, #tpu.memory_space<vmem>>, %arg9: memref<8x1xf32, #tpu.memory_space<vmem>>, %arg10: memref<8x32xf32, #tpu.memory_space<vmem>>) attributes {dimension_semantics = [#tpu.dimension_semantics<parallel>, #tpu.dimension_semantics<arbitrary>], iteration_bounds = array<i64: 2, 1>, scalar_prefetch = 0 : i64, scratch_operands = 3 : i64, tpu.core_type = #tpu.core_type<tc>, window_params = [{transform_indices = @transform_0, window_bounds = array<i64: 1, 8, 256>}, {transform_indices = @transform_1, window_bounds = array<i64: 1, 32, 256>}, {pipeline_mode = #tpu.pipeline_mode<synchronous>, transform_indices = @transform_2, window_bounds = array<i64: 16, 32>}, {pipeline_mode = #tpu.pipeline_mode<synchronous>, transform_indices = @transform_3, window_bounds = array<i64: 16, 1>}, {transform_indices = @transform_4, window_bounds = array<i64: 1, 8, 32>}, {transform_indices = @transform_5, window_bounds = array<i64: 1, 16, 256>}]} {
    %c0_i32 = arith.constant 0 : i32
    %0 = arith.cmpi eq, %arg1, %c0_i32 : i32
    %1 = arith.extui %0 : i1 to i32
    %c0_i32_0 = arith.constant 0 : i32
    %2 = arith.cmpi ne, %1, %c0_i32_0 : i32
    scf.if %2 {
      %cst_31 = arith.constant 0xFF800000 : f32
      %45 = vector.broadcast %cst_31 : f32 to vector<8x1xf32>
      %c0_32 = arith.constant 0 : index
      %c0_33 = arith.constant 0 : index
      %46 = vector.load %arg8[%c0_32, %c0_33] : memref<8x1xf32, #tpu.memory_space<vmem>>, vector<8x1xf32>
      tpu.vector_store %arg8[%c0_32, %c0_33], %45 {strides = array<i32>} : memref<8x1xf32, #tpu.memory_space<vmem>>, vector<8x1xf32>,
      %cst_34 = arith.constant 0.000000e+00 : f32
      %47 = vector.broadcast %cst_34 : f32 to vector<8x1xf32>
      %c0_35 = arith.constant 0 : index
      %c0_36 = arith.constant 0 : index
      %48 = vector.load %arg9[%c0_35, %c0_36] : memref<8x1xf32, #tpu.memory_space<vmem>>, vector<8x1xf32>
      tpu.vector_store %arg9[%c0_35, %c0_36], %47 {strides = array<i32>} : memref<8x1xf32, #tpu.memory_space<vmem>>, vector<8x1xf32>,
      %cst_37 = arith.constant 0.000000e+00 : f32
      %49 = vector.broadcast %cst_37 : f32 to vector<8x32xf32>
      %c0_38 = arith.constant 0 : index
      %c0_39 = arith.constant 0 : index
      %50 = vector.load %arg10[%c0_38, %c0_39] : memref<8x32xf32, #tpu.memory_space<vmem>>, vector<8x32xf32>
      tpu.vector_store %arg10[%c0_38, %c0_39], %49 {strides = array<i32>} : memref<8x32xf32, #tpu.memory_space<vmem>>, vector<8x32xf32>,
    } else {
    }
    %c0 = arith.constant 0 : index
    %c0_1 = arith.constant 0 : index
    %c0_2 = arith.constant 0 : index
    %3 = vector.load %arg3[%c0, %c0_1, %c0_2] : memref<1x32x256xbf16, #tpu.memory_space<vmem>>, vector<1x32x256xbf16>
    %4 = vector.shape_cast %3 : vector<1x32x256xbf16> to vector<32x256xbf16>
    %c0_3 = arith.constant 0 : index
    %c0_4 = arith.constant 0 : index
    %c0_5 = arith.constant 0 : index
    %5 = vector.load %arg2[%c0_3, %c0_4, %c0_5] : memref<1x8x256xbf16, #tpu.memory_space<vmem>>, vector<1x8x256xbf16>
    %6 = vector.shape_cast %5 : vector<1x8x256xbf16> to vector<8x256xbf16>
    %c0_6 = arith.constant 0 : index
    %c0_7 = arith.constant 0 : index
    %7 = vector.load %arg4[%c0_6, %c0_7] : memref<16x32xbf16, #tpu.memory_space<vmem>>, vector<16x32xbf16>
    %cst = arith.constant dense<0.000000e+00> : vector<16x256xf32>
    %8 = tpu.matmul %7, %4, %cst {dimension_numbers = #tpu.dot_dimension_numbers<[1], [0], [0], [1], [0, 0, 1, 1], [], []>} : vector<16x32xbf16>, vector<32x256xbf16>, vector<16x256xf32> -> vector<16x256xf32>
    %c0_8 = arith.constant 0 : index
    %c0_9 = arith.constant 0 : index
    %9 = vector.load %arg5[%c0_8, %c0_9] : memref<16x1xf32, #tpu.memory_space<vmem>>, vector<16x1xf32>
    %10 = vector.broadcast %9 : vector<16x1xf32> to vector<16x256xf32>
    %11 = arith.addf %8, %10 : vector<16x256xf32>
    %cst_10 = arith.constant 0.000000e+00 : f32
    %12 = vector.broadcast %cst_10 : f32 to vector<16x256xf32>
    %13 = arith.maximumf %11, %12 : vector<16x256xf32>
    %14 = arith.truncf %13 : vector<16x256xf32> to vector<16x256xbf16>
    %c0_11 = arith.constant 0 : index
    %c0_12 = arith.constant 0 : index
    %c0_13 = arith.constant 0 : index
    %15 = vector.load %arg7[%c0_11, %c0_12, %c0_13] : memref<1x16x256xbf16, #tpu.memory_space<vmem>>, vector<1x16x256xbf16>
    %16 = vector.shape_cast %15 : vector<1x16x256xbf16> to vector<16x256xbf16>
    %17 = vector.shape_cast %14 : vector<16x256xbf16> to vector<1x16x256xbf16>
    tpu.vector_store %arg7[%c0_11, %c0_12, %c0_13], %17 {strides = array<i32>} : memref<1x16x256xbf16, #tpu.memory_space<vmem>>, vector<1x16x256xbf16>,
    %18 = arith.extf %6 : vector<8x256xbf16> to vector<8x256xf32>
    %c0_14 = arith.constant 0 : index
    %c0_15 = arith.constant 0 : index
    %19 = vector.load %arg8[%c0_14, %c0_15] : memref<8x1xf32, #tpu.memory_space<vmem>>, vector<8x1xf32>
    %cst_16 = arith.constant dense<0xFF800000> : vector<8xf32>
    %20 = vector.multi_reduction <maximumf>, %18, %cst_16 [1] : vector<8x256xf32> to vector<8xf32>
    %21 = vector.shape_cast %20 : vector<8xf32> to vector<8x1xf32>
    %22 = arith.maximumf %19, %21 : vector<8x1xf32>
    %23 = arith.subf %19, %22 : vector<8x1xf32>
    %24 = math.exp %23 : vector<8x1xf32>
    %25 = vector.broadcast %22 : vector<8x1xf32> to vector<8x256xf32>
    %26 = arith.subf %18, %25 : vector<8x256xf32>
    %27 = math.exp %26 : vector<8x256xf32>
    %c0_17 = arith.constant 0 : index
    %c0_18 = arith.constant 0 : index
    %28 = vector.load %arg9[%c0_17, %c0_18] : memref<8x1xf32, #tpu.memory_space<vmem>>, vector<8x1xf32>
    %29 = arith.mulf %24, %28 : vector<8x1xf32>
    %cst_19 = arith.constant dense<0.000000e+00> : vector<8xf32>
    %30 = vector.multi_reduction <add>, %27, %cst_19 [1] : vector<8x256xf32> to vector<8xf32>
    %31 = vector.shape_cast %30 : vector<8xf32> to vector<8x1xf32>
    %32 = arith.addf %29, %31 : vector<8x1xf32>
    %c0_20 = arith.constant 0 : index
    %c0_21 = arith.constant 0 : index
    %33 = vector.load %arg9[%c0_20, %c0_21] : memref<8x1xf32, #tpu.memory_space<vmem>>, vector<8x1xf32>
    tpu.vector_store %arg9[%c0_20, %c0_21], %32 {strides = array<i32>} : memref<8x1xf32, #tpu.memory_space<vmem>>, vector<8x1xf32>,
    %c0_22 = arith.constant 0 : index
    %c0_23 = arith.constant 0 : index
    %34 = vector.load %arg10[%c0_22, %c0_23] : memref<8x32xf32, #tpu.memory_space<vmem>>, vector<8x32xf32>
    %35 = vector.broadcast %24 : vector<8x1xf32> to vector<8x32xf32>
    %36 = arith.mulf %35, %34 : vector<8x32xf32>
    %37 = arith.truncf %27 : vector<8x256xf32> to vector<8x256xbf16>
    %cst_24 = arith.constant dense<0.000000e+00> : vector<8x32xf32>
    %38 = tpu.matmul %37, %4, %cst_24 {dimension_numbers = #tpu.dot_dimension_numbers<[1], [1], [0], [0], [0, 0, 1, 0], [], []>} : vector<8x256xbf16>, vector<32x256xbf16>, vector<8x32xf32> -> vector<8x32xf32>
    %39 = arith.addf %36, %38 : vector<8x32xf32>
    %c0_25 = arith.constant 0 : index
    %c0_26 = arith.constant 0 : index
    %40 = vector.load %arg10[%c0_25, %c0_26] : memref<8x32xf32, #tpu.memory_space<vmem>>, vector<8x32xf32>
    tpu.vector_store %arg10[%c0_25, %c0_26], %39 {strides = array<i32>} : memref<8x32xf32, #tpu.memory_space<vmem>>, vector<8x32xf32>,
    %c0_27 = arith.constant 0 : index
    %c0_28 = arith.constant 0 : index
    %41 = vector.load %arg8[%c0_27, %c0_28] : memref<8x1xf32, #tpu.memory_space<vmem>>, vector<8x1xf32>
    tpu.vector_store %arg8[%c0_27, %c0_28], %22 {strides = array<i32>} : memref<8x1xf32, #tpu.memory_space<vmem>>, vector<8x1xf32>,
    %c0_i32_29 = arith.constant 0 : i32
    %42 = arith.cmpi eq, %arg1, %c0_i32_29 : i32
    %43 = arith.extui %42 : i1 to i32
    %c0_i32_30 = arith.constant 0 : i32
    %44 = arith.cmpi ne, %43, %c0_i32_30 : i32
    scf.if %44 {
      %c0_31 = arith.constant 0 : index
      %c0_32 = arith.constant 0 : index
      %45 = vector.load %arg10[%c0_31, %c0_32] : memref<8x32xf32, #tpu.memory_space<vmem>>, vector<8x32xf32>
      %c0_33 = arith.constant 0 : index
      %c0_34 = arith.constant 0 : index
      %46 = vector.load %arg9[%c0_33, %c0_34] : memref<8x1xf32, #tpu.memory_space<vmem>>, vector<8x1xf32>
      %47 = tpu.reciprocal %46 {approx = true} : vector<8x1xf32> -> vector<8x1xf32>
      %48 = vector.broadcast %47 : vector<8x1xf32> to vector<8x32xf32>
      %49 = arith.mulf %45, %48 : vector<8x32xf32>
      %c0_35 = arith.constant 0 : index
      %c0_36 = arith.constant 0 : index
      %c0_37 = arith.constant 0 : index
      %50 = vector.load %arg6[%c0_35, %c0_36, %c0_37] : memref<1x8x32xf32, #tpu.memory_space<vmem>>, vector<1x8x32xf32>
      %51 = vector.shape_cast %50 : vector<1x8x32xf32> to vector<8x32xf32>
      %52 = vector.shape_cast %49 : vector<8x32xf32> to vector<1x8x32xf32>
      tpu.vector_store %arg6[%c0_35, %c0_36, %c0_37], %52 {strides = array<i32>} : memref<1x8x32xf32, #tpu.memory_space<vmem>>, vector<1x8x32xf32>,
    } else {
    }
    return
  }
  func.func @transform_0(%arg0: i32, %arg1: i32) -> (i32, i32, i32) {
    %c0_i32 = arith.constant 0 : i32
    %c0_i32_0 = arith.constant 0 : i32
    return %arg0, %c0_i32, %arg1 : i32, i32, i32
  }
  func.func @transform_1(%arg0: i32, %arg1: i32) -> (i32, i32, i32) {
    %c0_i32 = arith.constant 0 : i32
    %c0_i32_0 = arith.constant 0 : i32
    return %arg0, %c0_i32, %arg1 : i32, i32, i32
  }
  func.func @transform_2(%arg0: i32, %arg1: i32) -> (i32, i32) {
    %c0_i32 = arith.constant 0 : i32
    %c0_i32_0 = arith.constant 0 : i32
    %c0_i32_1 = arith.constant 0 : i32
    return %c0_i32, %c0_i32_0 : i32, i32
  }
  func.func @transform_3(%arg0: i32, %arg1: i32) -> (i32, i32) {
    %c0_i32 = arith.constant 0 : i32
    %c0_i32_0 = arith.constant 0 : i32
    %c0_i32_1 = arith.constant 0 : i32
    return %c0_i32, %c0_i32_0 : i32, i32
  }
  func.func @transform_4(%arg0: i32, %arg1: i32) -> (i32, i32, i32) {
    %c0_i32 = arith.constant 0 : i32
    %c0_i32_0 = arith.constant 0 : i32
    %c0_i32_1 = arith.constant 0 : i32
    return %arg0, %c0_i32, %c0_i32_0 : i32, i32, i32
  }
  func.func @transform_5(%arg0: i32, %arg1: i32) -> (i32, i32, i32) {
    %c0_i32 = arith.constant 0 : i32
    %c0_i32_0 = arith.constant 0 : i32
    return %arg0, %c0_i32, %arg1 : i32, i32, i32
  }
}

</mosaic_0001>

<llo_original>
// kernel: tpu_custom_call.1
$region0: #{tpu_custom_call.1}
  #allocation0 [shape = 'u32[]', space=smem, size = 0x4, offset = 0x4, fixed_abs, tag = 'smem constant byte address 0x4 - core index']
  #allocation1 [shape = 'u32[144,128]{1,0:T(1,128)}', space=vmem, size = 0x12000, scoped, tag = 'internal scratch']
  #allocation2 [shape = 'f32[8,1]{1,0:T(8,128)}', space=vmem, size = 0x1000, scoped, tag = 'scratch operand']
  #allocation3 [shape = 'f32[8,1]{1,0:T(8,128)}', space=vmem, size = 0x1000, scoped, tag = 'scratch operand']
  #allocation4 [shape = 'f32[8,32]{1,0:T(8,128)}', space=vmem, size = 0x1000, scoped, tag = 'scratch operand']
  %s0 = inlined_call_operand.vmem [shape: bf16[2,8,256], index: 0, kind: input, shape index: {}]
  %s1 = inlined_call_operand.hbm [shape: bf16[2,32,256], index: 1, kind: input, shape index: {}]
  %s2 = inlined_call_operand.vmem [shape: bf16[16,32], index: 2, kind: input, shape index: {}]
  %s3 = inlined_call_operand.vmem [shape: f32[16,1], index: 3, kind: input, shape index: {}]
  %s4 = inlined_call_operand.hbm [shape: f32[2,8,32], index: 4, kind: output, shape index: {0}]
  %s5 = inlined_call_operand.hbm [shape: bf16[2,16,256], index: 5, kind: output, shape index: {1}]
  %6 = xla_tuple %s4, %s5
  %s7 = sld [smem:[#allocation0]]
  $region69: #{tpu_custom_call.1} parent=0
    _
  %s9 = ssub.s32 1, %s7
  %s10 = scalar_select 0, %s9, %s7
  $region1: #{tpu_custom_call.1} parent=0
    #allocation5 [shape = 'u8[32768]{0}', space=vmem, size = 0x8000, scoped, tag = 'input window, operand 1']
    #allocation6 [shape = 's32[2]{0}', space=sflag, size = 0x8, scoped, tag = 'scoped memory for tpu_custom_call.1']
    #allocation7 [shape = 's32[2]{0}', space=sflag, size = 0x8, scoped, tag = 'scoped memory for tpu_custom_call.1']
    #allocation8 [shape = 'u8[8192]{0}', space=vmem, size = 0x2000, scoped, tag = 'output window, operand 0']
    #allocation9 [shape = 'u8[16384]{0}', space=vmem, size = 0x4000, scoped, tag = 'output window, operand 1']
    #allocation10 [shape = 's32[2]{0}', space=sflag, size = 0x8, scoped, tag = 'scoped memory for tpu_custom_call.1']
    %11 = vsyncpa [#allocation6], 0
    %s12 = scalar_lea.sflag [#allocation6], 1
    %13 = vsyncpa %s12, 0
    %14 = vsyncpa [#allocation7], 0
    %s15 = scalar_lea.sflag [#allocation7], 1
    %16 = vsyncpa %s15, 0
    %17 = vsyncpa [#allocation10], 0
    %s18 = scalar_lea.sflag [#allocation10], 1
    %19 = vsyncpa %s18, 0
    loop: start=0, step=1, limit=4
    $region2: #{tpu_custom_call.1} parent=1 // loop_pre_header
      _
    $region3: #{tpu_custom_call.1} parent=1 // loop_header
      %s21 = sphi 0, %s25
      %p22 = scmp.ge.s32.totalorder %s21, 4
      %s28 = sphi 0, %s40
      %s29 = sphi 0, %s36
      %s30 = sphi 0, %s28
      %s31 = sphi 0, %s29
      %s32 = sphi 0, %s30
      %s33 = sphi 0, %s31
      %s45 = sphi 0, %s47
      %s48 = sphi 0, %s45
      %s49 = sphi 0, %s48
      %s65 = sphi 0, %s49
      %s73 = sphi 0, %s75
      %s76 = sphi 0, %s73
      %s77 = sphi 0, %s76
      %s93 = sphi 0, %s77
      %s97 = sphi 0, %s97
      %s99 = sphi 0, %s97
      %s100 = sphi 0, %s99
      %s114 = sphi 0, %s100
      %s118 = sphi 0, %s118
      %s120 = sphi 0, %s118
      %s121 = sphi 0, %s120
      %s135 = sphi 0, %s121
      %s141 = sphi 0, %s143
      %s144 = sphi 0, %s141
      %s145 = sphi 0, %s144
      %s161 = sphi 0, %s145
      %s169 = sphi 0, %s171
      %s172 = sphi 0, %s169
      %s173 = sphi 0, %s172
      %s189 = sphi 0, %s173
    $region4: #{tpu_custom_call.1} parent=1 // loop_header_branch
      %24 = sbr.rel (%p22) target = $region8
    $region5: #{tpu_custom_call.1} parent=1 // loop_body
      %s26 = ssub.s32 %s21, 1
      %s27 = ssub.s32 %s21, 2
      %s34 = sadd.s32 1, %s29
      %p35 = scmp.ge.s32.totalorder %s34, 1
      %s36 = scalar_select %p35, 0, %s34
      %s37 = sadd.s32 1, %s28
      %s38 = scalar_select %p35, %s37, %s28
      %p39 = scmp.ge.s32.totalorder %s38, 2
      %s40 = scalar_select %p39, 0, %s38
      %s41 = ssub.s32 %s28, %s40
      %s42 = ssub.s32 %s29, %s36
      %s43 = sor.u32 %s41, %s42
      %p44 = scmp.eq.s32.totalorder %s43, 0
      %s46 = sadd.s32 %s45, 1
      %s47 = scalar_select %p44, %s45, %s46
      %p50 = pneg %p44
      %p51 = scmp.eq.s32.totalorder %s21, 1
      %p52 = por %p50, %p51
      %p53 = scmp.ne.s32.totalorder %s45, %s48
      %p54 = scmp.eq.s32.totalorder %s21, 0
      %p55 = por %p53, %p54
      %p56 = scmp.ne.s32.totalorder %s45, %s48
      %p57 = scmp.eq.s32.totalorder %s26, 1
      %p58 = por %p56, %p57
      %p59 = scmp.ne.s32.totalorder %s48, %s49
      %p60 = scmp.eq.s32.totalorder %s26, 0
      %p61 = por %p59, %p60
      %p62 = scmp.ne.s32.totalorder %s48, %s49
      %p63 = scmp.eq.s32.totalorder %s27, 1
      %p64 = por %p62, %p63
      %p66 = scmp.ne.s32.totalorder %s49, %s65
      %p67 = scmp.eq.s32.totalorder %s27, 0
      %p68 = por %p66, %p67
      %s69 = ssub.s32 %s28, %s40
      %s70 = ssub.s32 %s29, %s36
      %s71 = sor.u32 %s69, %s70
      %p72 = scmp.eq.s32.totalorder %s71, 0
      %s74 = sadd.s32 %s73, 1
      %s75 = scalar_select %p72, %s73, %s74
      %p78 = pneg %p72
      %p79 = scmp.eq.s32.totalorder %s21, 1
      %p80 = por %p78, %p79
      %p81 = scmp.ne.s32.totalorder %s73, %s76
      %p82 = scmp.eq.s32.totalorder %s21, 0
      %p83 = por %p81, %p82
      %p84 = scmp.ne.s32.totalorder %s73, %s76
      %p85 = scmp.eq.s32.totalorder %s26, 1
      %p86 = por %p84, %p85
      %p87 = scmp.ne.s32.totalorder %s76, %s77
      %p88 = scmp.eq.s32.totalorder %s26, 0
      %p89 = por %p87, %p88
      %p90 = scmp.ne.s32.totalorder %s76, %s77
      %p91 = scmp.eq.s32.totalorder %s27, 1
      %p92 = por %p90, %p91
      %p94 = scmp.ne.s32.totalorder %s77, %s93
      %p95 = scmp.eq.s32.totalorder %s27, 0
      %p96 = por %p94, %p95
      %s98 = sadd.s32 %s97, 1
      %p101 = scmp.eq.s32.totalorder %s21, 1
      %p102 = scmp.ne.s32.totalorder %s97, %s99
      %p103 = scmp.eq.s32.totalorder %s21, 0
      %p104 = por %p102, %p103
      %p105 = scmp.ne.s32.totalorder %s97, %s99
      %p106 = scmp.eq.s32.totalorder %s26, 1
      %p107 = por %p105, %p106
      %p108 = scmp.ne.s32.totalorder %s99, %s100
      %p109 = scmp.eq.s32.totalorder %s26, 0
      %p110 = por %p108, %p109
      %p111 = scmp.ne.s32.totalorder %s99, %s100
      %p112 = scmp.eq.s32.totalorder %s27, 1
      %p113 = por %p111, %p112
      %p115 = scmp.ne.s32.totalorder %s100, %s114
      %p116 = scmp.eq.s32.totalorder %s27, 0
      %p117 = por %p115, %p116
      %s119 = sadd.s32 %s118, 1
      %p122 = scmp.eq.s32.totalorder %s21, 1
      %p123 = scmp.ne.s32.totalorder %s118, %s120
      %p124 = scmp.eq.s32.totalorder %s21, 0
      %p125 = por %p123, %p124
      %p126 = scmp.ne.s32.totalorder %s118, %s120
      %p127 = scmp.eq.s32.totalorder %s26, 1
      %p128 = por %p126, %p127
      %p129 = scmp.ne.s32.totalorder %s120, %s121
      %p130 = scmp.eq.s32.totalorder %s26, 0
      %p131 = por %p129, %p130
      %p132 = scmp.ne.s32.totalorder %s120, %s121
      %p133 = scmp.eq.s32.totalorder %s27, 1
      %p134 = por %p132, %p133
      %p136 = scmp.ne.s32.totalorder %s121, %s135
      %p137 = scmp.eq.s32.totalorder %s27, 0
      %p138 = por %p136, %p137
      %s139 = ssub.s32 %s28, %s40
      %p140 = scmp.eq.s32.totalorder %s139, 0
      %s142 = sadd.s32 %s141, 1
      %s143 = scalar_select %p140, %s141, %s142
      %p146 = pneg %p140
      %p147 = scmp.eq.s32.totalorder %s21, 1
      %p148 = por %p146, %p147
      %p149 = scmp.ne.s32.totalorder %s141, %s144
      %p150 = scmp.eq.s32.totalorder %s21, 0
      %p151 = por %p149, %p150
      %p152 = scmp.ne.s32.totalorder %s141, %s144
      %p153 = scmp.eq.s32.totalorder %s26, 1
      %p154 = por %p152, %p153
      %p155 = scmp.ne.s32.totalorder %s144, %s145
      %p156 = scmp.eq.s32.totalorder %s26, 0
      %p157 = por %p155, %p156
      %p158 = scmp.ne.s32.totalorder %s144, %s145
      %p159 = scmp.eq.s32.totalorder %s27, 1
      %p160 = por %p158, %p159
      %p162 = scmp.ne.s32.totalorder %s145, %s161
      %p163 = scmp.eq.s32.totalorder %s27, 0
      %p164 = por %p162, %p163
      %s165 = ssub.s32 %s28, %s40
      %s166 = ssub.s32 %s29, %s36
      %s167 = sor.u32 %s165, %s166
      %p168 = scmp.eq.s32.totalorder %s167, 0
      %s170 = sadd.s32 %s169, 1
      %s171 = scalar_select %p168, %s169, %s170
      %p174 = pneg %p168
      %p175 = scmp.eq.s32.totalorder %s21, 1
      %p176 = por %p174, %p175
      %p177 = scmp.ne.s32.totalorder %s169, %s172
      %p178 = scmp.eq.s32.totalorder %s21, 0
      %p179 = por %p177, %p178
      %p180 = scmp.ne.s32.totalorder %s169, %s172
      %p181 = scmp.eq.s32.totalorder %s26, 1
      %p182 = por %p180, %p181
      %p183 = scmp.ne.s32.totalorder %s172, %s173
      %p184 = scmp.eq.s32.totalorder %s26, 0
      %p185 = por %p183, %p184
      %p186 = scmp.ne.s32.totalorder %s172, %s173
      %p187 = scmp.eq.s32.totalorder %s27, 1
      %p188 = por %p186, %p187
      %p190 = scmp.ne.s32.totalorder %s173, %s189
      %p191 = scmp.eq.s32.totalorder %s27, 0
      %p192 = por %p190, %p191
      %p193 = scmp.le.s32.totalorder 1, %s21
      %p194 = scmp.lt.s32.totalorder %s21, 3
      %p195 = pnand %p193, %p194
      %p196 = pneg %p195
      // Predicated region
      $region9: #{tpu_custom_call.1} parent=5 // pred_check
        _
      $region10: #{tpu_custom_call.1} parent=5 // pred_check_branch
        %198 = sbr.rel (%p195) target = $region12
      $region11: #{tpu_custom_call.1} parent=5 // pred_region
        %s199 = ssub.s32 %s21, 1
        // Predicated region
        $region13: #{tpu_custom_call.1} parent=11 // pred_check
          %p200 = pneg %p110
        $region14: #{tpu_custom_call.1} parent=11 // pred_check_branch
          %202 = sbr.rel (%p200) target = $region16
        $region15: #{tpu_custom_call.1} parent=11 // pred_region
          _
        $region16: #{tpu_custom_call.1} parent=11 // pred_fallthru
          _
        // Predicated region
        $region17: #{tpu_custom_call.1} parent=11 // pred_check
          %p203 = pneg %p131
        $region18: #{tpu_custom_call.1} parent=11 // pred_check_branch
          %205 = sbr.rel (%p203) target = $region20
        $region19: #{tpu_custom_call.1} parent=11 // pred_region
          _
        $region20: #{tpu_custom_call.1} parent=11 // pred_fallthru
          _
      $region12: #{tpu_custom_call.1} parent=5 // pred_fallthru
        _
      %p206 = scmp.lt.s32.totalorder %s21, 2
      // Predicated region
      $region21: #{tpu_custom_call.1} parent=5 // pred_check
        %p207 = pneg %p206
      $region22: #{tpu_custom_call.1} parent=5 // pred_check_branch
        %209 = sbr.rel (%p207) target = $region24
      $region23: #{tpu_custom_call.1} parent=5 // pred_region
        // Predicated region
        $region25: #{tpu_custom_call.1} parent=23 // pred_check
          %p210 = pneg %p55
        $region26: #{tpu_custom_call.1} parent=23 // pred_check_branch
          %212 = sbr.rel (%p210) target = $region28
        $region27: #{tpu_custom_call.1} parent=23 // pred_region
          %s213 = smul.u32 2, %s29
          %p214 = scmp.lt.s32.totalorder %s28, 1
          %s215 = scalar_select %p214, %s28, 1
          %p216 = scmp.lt.s32.totalorder %s213, 1
          %s217 = scalar_select %p216, %s213, 1
          %s218 = smul.addr %s215, 2
          %s219 = sadd.s32 %s217, %s218
          %s220 = smul.addr %s219, 4
          %s221 = scalar_lea.vmem %s0, %s220
          %s222 = smul.u32 2, %s29
        $region28: #{tpu_custom_call.1} parent=23 // pred_fallthru
          _
        // Predicated region
        $region29: #{tpu_custom_call.1} parent=23 // pred_check
          %p223 = pneg %p83
        $region30: #{tpu_custom_call.1} parent=23 // pred_check_branch
          %225 = sbr.rel (%p223) target = $region32
        $region31: #{tpu_custom_call.1} parent=23 // pred_region
          %s226 = sand.u32 %s73, 1
          %s227 = scalar_lea.sflag [#allocation6], %s226
          %s228 = sand.u32 %s73, 1
          %s229 = smul.addr %s228, 32
          %s230 = scalar_lea.vmem [#allocation5], %s229
          %s231 = smul.u32 2, %s29
          %s233 = ssub.s32 512, 512
          %234 = vsyncadd %s227, %s233
          %s235 = smul.addr %s28, 8
          %s236 = sadd.s32 %s231, %s235
          %s237 = smul.addr %s236, 64
          %s238 = scalar_lea.hbm %s1, %s237
          %s239 = sshll.u32 %s230, 4
          %s240 = int_to_ptr.vmem [resolvable:$true] %s239
          %245 = dma.hbm_to_vmem [thread:$0]  %s238, 512, %s240, %s227, 128, 128, 8
        $region32: #{tpu_custom_call.1} parent=23 // pred_fallthru
          _
      $region24: #{tpu_custom_call.1} parent=5 // pred_fallthru
        _
      %p246 = scmp.le.s32.totalorder 1, %s21
      %p247 = scmp.lt.s32.totalorder %s21, 3
      %p248 = pnand %p246, %p247
      %p249 = pneg %p248
      // Predicated region
      $region33: #{tpu_custom_call.1} parent=5 // pred_check
        _
      $region34: #{tpu_custom_call.1} parent=5 // pred_check_branch
        %251 = sbr.rel (%p248) target = $region36
      $region35: #{tpu_custom_call.1} parent=5 // pred_region
        %s252 = ssub.s32 %s21, 1
        %s253 = sand.u32 %s76, 1
        %s254 = scalar_lea.sflag [#allocation6], %s253
        %s255 = sand.u32 %s76, 1
        %s256 = smul.addr %s255, 32
        %s257 = scalar_lea.vmem [#allocation5], %s256
        // Predicated region
        $region37: #{tpu_custom_call.1} parent=35 // pred_check
          %p258 = pneg %p89
        $region38: #{tpu_custom_call.1} parent=35 // pred_check_branch
          %260 = sbr.rel (%p258) target = $region40
        $region39: #{tpu_custom_call.1} parent=35 // pred_region
          %261 = dma.done %s254, 512
        $region40: #{tpu_custom_call.1} parent=35 // pred_fallthru
          _
        %s262 = smul.u32 2, %s31
        %p263 = scmp.lt.s32.totalorder %s30, 1
        %s264 = scalar_select %p263, %s30, 1
        %p265 = scmp.lt.s32.totalorder %s262, 1
        %s266 = scalar_select %p265, %s262, 1
        %s267 = smul.addr %s264, 2
        %s268 = sadd.s32 %s266, %s267
        %s269 = smul.addr %s268, 4
        %s270 = scalar_lea.vmem %s0, %s269
        %p271 = pneg %p61
        %p272 = pneg %p58
        %s273 = sand.u32 %s76, 1
        %s274 = scalar_lea.sflag [#allocation6], %s273
        %s275 = sand.u32 %s76, 1
        %s276 = smul.addr %s275, 32
        %s277 = scalar_lea.vmem [#allocation5], %s276
        %p278 = pneg %p89
        %p279 = pneg %p86
        %p280 = pneg %p110
        %p281 = pneg %p107
        %p282 = pneg %p131
        %p283 = pneg %p128
        %p284 = pneg %p157
        %p285 = pneg %p154
        %s286 = sand.u32 %s144, 1
        %s287 = scalar_lea.sflag [#allocation7], %s286
        %s288 = sand.u32 %s144, 1
        %s289 = smul.addr %s288, 8
        %s290 = scalar_lea.vmem [#allocation8], %s289
        %p291 = pneg %p185
        %p292 = pneg %p182
        %s293 = sand.u32 %s172, 1
        %s294 = scalar_lea.sflag [#allocation10], %s293
        %s295 = sand.u32 %s172, 1
        %s296 = smul.addr %s295, 16
        %s297 = scalar_lea.vmem [#allocation9], %s296
        %s298 = smul.u32 2, %s31
        %p299 = scmp.lt.s32.totalorder %s30, 1
        %s300 = scalar_select %p299, %s30, 1
        %p301 = scmp.lt.s32.totalorder %s298, 1
        %s302 = scalar_select %p301, %s298, 1
        %s303 = smul.addr %s300, 2
        %s304 = sadd.s32 %s302, %s303
        %s305 = smul.addr %s304, 4
        %s306 = scalar_lea.vmem %s0, %s305
        %s307 = smul.u32 2, %s31
        %s308 = smul.u32 2, %s31
        %s309 = smul.u32 2, %s31
        %p311 = scmp.eq.s32.totalorder %s31, 0
        // Predicated region
        $region41: #{tpu_custom_call.1} parent=35 // pred_check
          %p312 = pneg %p311
        $region42: #{tpu_custom_call.1} parent=35 // pred_check_branch
          %314 = sbr.rel (%p312) target = $region44
        $region43: #{tpu_custom_call.1} parent=35 // pred_region
          %vm315 = vcmask 7168
          %316 = vst.msk [vmem:[#allocation2] sm:$0xff] %vm315, -inf
          %317 = vst.msk [vmem:[#allocation3] sm:$0xff] %vm315, 0.0
          %vm318 = vcmask 261120
          %319 = vst.msk [vmem:[#allocation4] sm:$0xff] %vm318, 0.0
        $region44: #{tpu_custom_call.1} parent=35 // pred_fallthru
          _
        %v320 = vld [vmem:[%s257] sm:$0xff]
        %v321 = vld [vmem:[%s257 + $0x8] sm:$0xff]
        %v322 = vld [vmem:[%s257 + $0x10] sm:$0xff]
        %v323 = vld [vmem:[%s257 + $0x18] sm:$0xff]
        %v324 = vld [vmem:[%s306] sm:$0xff]
        %v325 = vld [vmem:[%s2] sm:$0xf]
        %v326 = vld [vmem:[%s2 + $0x4] sm:$0xf]
        %v327 = vld [vmem:[%s3] sm:$0xff]
        %v328 = vld [vmem:[%s3 + $0x8] sm:$0xff]
        %330 = vset.pattern.permute.xlu0 0
        %331 = vperm.xlu0 %330, %v327
        %v332 = vpop.permute.xlu0 %331
        %335 = vset.pattern.permute.xlu0 0
        %336 = vperm.xlu0 %335, %v328
        %v337 = vpop.permute.xlu0 %336
        %v341 = vunpack.c.l.b16 %v325
        %v342 = vunpack.c.l.b16 %v326
        %v343 = vpack.c.b16 %v342, %v341
        %v348 = vunpack.c.l.b16 %v320
        %v349 = vunpack.c.h.b16 %v320
        %v350 = vunpack.c.l.b16 %v321
        %v351 = vunpack.c.h.b16 %v321
        %v352 = vunpack.c.l.b16 %v322
        %v353 = vunpack.c.h.b16 %v322
        %v354 = vunpack.c.l.b16 %v323
        %v355 = vunpack.c.h.b16 %v323
        %v356 = vpack.c.b16 %v350, %v348
        %v357 = vpack.c.b16 %v351, %v349
        %v358 = vpack.c.b16 %v354, %v352
        %v359 = vpack.c.b16 %v355, %v353
        %vm364 = vcmask 261120
        %v366 = vsel %vm364, %v343, 0
        %368 = vmatprep.subr.bf16.mxu0 %v357
        %369 = vmatpush1.bf16.msra.mxu0 %v356
        %370 = vmatprep.subr.bf16.mxu0 %v359
        %371 = vmatpush1.bf16.msra.mxu0 %v358
        %372 = vmatprep.subr.bf16.mxu0 0
        %373 = vmatpush1.bf16.msra.mxu0 0
        %374 = vmatprep.subr.bf16.mxu0 0
        %375 = vmatpush1.bf16.msra.mxu0 0
        %376 = vmatprep.subr.bf16.mxu0 0
        %377 = vmatpush1.bf16.msra.mxu0 0
        %378 = vmatprep.subr.bf16.mxu0 0
        %379 = vmatpush1.bf16.msra.mxu0 0
        %380 = vmatprep.subr.bf16.mxu0 0
        %381 = vmatpush1.bf16.msra.mxu0 0
        %382 = vmatprep.subr.bf16.mxu0 0
        %383 = vmatpush1.bf16.msra.mxu0 0
        %384 = vmatprep.subr.bf16.mxu0 0
        %385 = vmatpush1.bf16.msra.mxu0 0
        %386 = vmatprep.subr.bf16.mxu0 0
        %387 = vmatpush1.bf16.msra.mxu0 0
        %388 = vmatprep.subr.bf16.mxu0 0
        %389 = vmatpush1.bf16.msra.mxu0 0
        %390 = vmatprep.subr.bf16.mxu0 0
        %391 = vmatpush1.bf16.msra.mxu0 0
        %392 = vmatprep.subr.bf16.mxu0 0
        %393 = vmatpush1.bf16.msra.mxu0 0
        %394 = vmatprep.subr.bf16.mxu0 0
        %395 = vmatpush1.bf16.msra.mxu0 0
        %396 = vmatprep.subr.bf16.mxu0 0
        %397 = vmatpush1.bf16.msra.mxu0 0
        %398 = vmatprep.subr.bf16.mxu0 0
        %399 = vmatpush1.bf16.msra.mxu0 0
        %400 = vmatprep.mubr.bf16.mxu0 0
        %401 = vmatmul.mubr.bf16.gmra.mrb[0].mxu0 %v366
        %v402 = vpop.f32.mrb[0].mxu0
        %v403 = vadd.f32 %v332, %v402
        %v404 = vpop.f32.mrb[0].mxu0
        %v405 = vadd.f32 %v332, %v404
        %v406 = vpop.f32.mrb[0].mxu0
        %v407 = vadd.f32 %v337, %v406
        %v408 = vpop.f32.mrb[0].mxu0
        %v409 = vadd.f32 %v337, %v408
        %410 = vdwg.mxu0
        %v411 = vmax.f32 %v403, 0.0
        %v412 = vmax.f32 %v405, 0.0
        %v413 = vmax.f32 %v407, 0.0
        %v414 = vmax.f32 %v409, 0.0
        %v415 = vpack.c.bf16 %v413, %v411
        %v416 = vpack.c.bf16 %v414, %v412
        %v419 = vunpack.c.l.b16 %v415
        %v420 = vunpack.c.l.b16 %v416
        %v421 = vunpack.c.h.b16 %v415
        %v422 = vunpack.c.h.b16 %v416
        %v423 = vpack.c.b16 %v420, %v419
        %v424 = vpack.c.b16 %v422, %v421
        %427 = vst [vmem:[%s297] sm:$0xff] %v423
        %428 = vst [vmem:[%s297 + $0x8] sm:$0xff] %v424
        %v429 = vunpack.c.l.bf16 %v324
        %v430 = vunpack.c.h.bf16 %v324
        %v431 = vld [vmem:[#allocation2] sm:$0xff]
        %v432 = vmax.f32 %v429, %v430
        %433 = vmax.xlane.f32.xlu0 %v432
        %v434 = vpop.xlane.xlu0 %433
        %v435 = vmax.f32 %v431, %v434
        %v436 = vsub.f32 %v431, %v435
        %v437 = vmul.f32 %v436, 1.442695
        %v438 = vpow.pop %v437
        %440 = vset.pattern.permute.xlu0 0
        %441 = vperm.xlu0 %440, %v435
        %v442 = vpop.permute.xlu0 %441
        %v444 = vsub.f32 %v429, %v442
        %v445 = vsub.f32 %v430, %v442
        %v446 = vmul.f32 %v444, 1.442695
        %v447 = vpow.pop %v446
        %v448 = vmul.f32 %v445, 1.442695
        %v449 = vpow.pop %v448
        %v450 = vld [vmem:[#allocation3] sm:$0xff]
        %v451 = vmul.f32 %v438, %v450
        %v452 = vadd.f32 %v447, %v449
        %453 = vadd.xlane.f32.xlu0 %v452
        %v454 = vpop.xlane.xlu0 %453
        %v455 = vadd.f32 %v451, %v454
        %vm456 = vcmask 7168
        %457 = vst.msk [vmem:[#allocation3] sm:$0xff] %vm456, %v455
        %v458 = vld [vmem:[#allocation4] sm:$0xff]
        %460 = vset.pattern.permute.xlu0 0
        %461 = vperm.xlu0 %460, %v438
        %v462 = vpop.permute.xlu0 %461
        %v464 = vmul.f32 %v462, %v458
        %v465 = vpack.c.bf16 %v447, %v447
        %v466 = vpack.c.bf16 %v449, %v449
        %467 = vmatprep.subr.bf16.mxu0 %v357
        %468 = vmatpush1.bf16.xpose.msra.mxu0 %v356
        %469 = vmatprep.subr.bf16.mxu0 %v359
        %470 = vmatpush1.bf16.xpose.msra.mxu0 %v358
        %471 = vmatprep.subr.bf16.mxu0 0
        %472 = vmatpush1.bf16.xpose.msra.mxu0 0
        %473 = vmatprep.subr.bf16.mxu0 0
        %474 = vmatpush1.bf16.xpose.msra.mxu0 0
        %475 = vmatprep.subr.bf16.mxu0 0
        %476 = vmatpush1.bf16.xpose.msra.mxu0 0
        %477 = vmatprep.subr.bf16.mxu0 0
        %478 = vmatpush1.bf16.xpose.msra.mxu0 0
        %479 = vmatprep.subr.bf16.mxu0 0
        %480 = vmatpush1.bf16.xpose.msra.mxu0 0
        %481 = vmatprep.subr.bf16.mxu0 0
        %482 = vmatpush1.bf16.xpose.msra.mxu0 0
        %483 = vmatprep.subr.bf16.mxu0 0
        %484 = vmatpush1.bf16.xpose.msra.mxu0 0
        %485 = vmatprep.subr.bf16.mxu0 0
        %486 = vmatpush1.bf16.xpose.msra.mxu0 0
        %487 = vmatprep.subr.bf16.mxu0 0
        %488 = vmatpush1.bf16.xpose.msra.mxu0 0
        %489 = vmatprep.subr.bf16.mxu0 0
        %490 = vmatpush1.bf16.xpose.msra.mxu0 0
        %491 = vmatprep.subr.bf16.mxu0 0
        %492 = vmatpush1.bf16.xpose.msra.mxu0 0
        %493 = vmatprep.subr.bf16.mxu0 0
        %494 = vmatpush1.bf16.xpose.msra.mxu0 0
        %495 = vmatprep.subr.bf16.mxu0 0
        %496 = vmatpush1.bf16.xpose.msra.mxu0 0
        %497 = vmatprep.subr.bf16.mxu0 0
        %498 = vmatpush1.bf16.xpose.msra.mxu0 0
        %499 = vmatprep.mubr.bf16.mxu0 %v466
        %500 = vmatmul.mubr.bf16.gmra.mrb[0].mxu0 %v465
        %v501 = vpop.f32.mrb[0].mxu0
        %v502 = vadd.f32 0.0, %v501
        %v503 = vpop.f32.mrb[0].mxu0
        %v504 = vpop.f32.mrb[0].mxu0
        %v505 = vpop.f32.mrb[0].mxu0
        %506 = vdwg.mxu0
        %v507 = vadd.f32 %v464, %v502
        %508 = vst.msk [vmem:[#allocation4] sm:$0xff] %vm364, %v507
        %509 = vst.msk [vmem:[#allocation2] sm:$0xff] %vm456, %v435
        // Predicated region
        $region45: #{tpu_custom_call.1} parent=35 // pred_check
          %p510 = pneg %p311
        $region46: #{tpu_custom_call.1} parent=35 // pred_check_branch
          %512 = sbr.rel (%p510) target = $region48
        $region47: #{tpu_custom_call.1} parent=35 // pred_region
          %v513 = vld [vmem:[#allocation4] sm:$0xff]
          %v514 = vld [vmem:[#allocation3] sm:$0xff]
          %v515 = vrcp.pop %v514
          %517 = vset.pattern.permute.xlu0 0
          %518 = vperm.xlu0 %517, %v515
          %v519 = vpop.permute.xlu0 %518
          %v521 = vmul.f32 %v513, %v519
          %522 = vst.msk [vmem:[%s290] sm:$0xff] %vm364, %v521
        $region48: #{tpu_custom_call.1} parent=35 // pred_fallthru
          _
        %s523 = sand.u32 %s144, 1
        %s524 = scalar_lea.sflag [#allocation7], %s523
        %s525 = sand.u32 %s144, 1
        %s526 = smul.addr %s525, 8
        %s527 = scalar_lea.vmem [#allocation8], %s526
        %s528 = sand.u32 %s172, 1
        %s529 = scalar_lea.sflag [#allocation10], %s528
        %s530 = sand.u32 %s172, 1
        %s531 = smul.addr %s530, 16
        %s532 = scalar_lea.vmem [#allocation9], %s531
        // Predicated region
        $region49: #{tpu_custom_call.1} parent=35 // pred_check
          %p533 = pneg %p154
        $region50: #{tpu_custom_call.1} parent=35 // pred_check_branch
          %535 = sbr.rel (%p533) target = $region52
        $region51: #{tpu_custom_call.1} parent=35 // pred_region
          %s537 = ssub.s32 128, 128
          %538 = vsyncadd %s524, %s537
          %s539 = smul.addr %s30, 128
          %s540 = scalar_lea.hbm %s4, %s539
          %s542 = sshll.u32 %s527, 4
          %s543 = int_to_ptr.vmem [resolvable:$true] %s542
          %545 = dma.vmem_to_hbm [thread:$0]  %s543, 128, %s540, %s524
        $region52: #{tpu_custom_call.1} parent=35 // pred_fallthru
          _
        // Predicated region
        $region53: #{tpu_custom_call.1} parent=35 // pred_check
          %p546 = pneg %p182
        $region54: #{tpu_custom_call.1} parent=35 // pred_check_branch
          %548 = sbr.rel (%p546) target = $region56
        $region55: #{tpu_custom_call.1} parent=35 // pred_region
          %s549 = smul.u32 2, %s31
          %s551 = ssub.s32 256, 256
          %552 = vsyncadd %s529, %s551
          %s553 = smul.addr %s30, 4
          %s554 = sadd.s32 %s549, %s553
          %s555 = smul.addr %s554, 64
          %s556 = scalar_lea.hbm %s5, %s555
          %s557 = sshll.u32 %s532, 4
          %s558 = int_to_ptr.vmem [resolvable:$true] %s557
          %563 = dma.vmem_to_hbm [thread:$0]  %s558, 256, %s556, %s529, 128, 128, 8
        $region56: #{tpu_custom_call.1} parent=35 // pred_fallthru
          _
      $region36: #{tpu_custom_call.1} parent=5 // pred_fallthru
        _
      %p564 = scmp.le.s32.totalorder 2, %s21
      // Predicated region
      $region57: #{tpu_custom_call.1} parent=5 // pred_check
        %p565 = pneg %p564
      $region58: #{tpu_custom_call.1} parent=5 // pred_check_branch
        %567 = sbr.rel (%p565) target = $region60
      $region59: #{tpu_custom_call.1} parent=5 // pred_region
        %s568 = ssub.s32 %s21, 2
        // Predicated region
        $region61: #{tpu_custom_call.1} parent=59 // pred_check
          %p569 = pneg %p160
        $region62: #{tpu_custom_call.1} parent=59 // pred_check_branch
          %571 = sbr.rel (%p569) target = $region64
        $region63: #{tpu_custom_call.1} parent=59 // pred_region
          %s572 = sand.u32 %s145, 1
          %s573 = scalar_lea.sflag [#allocation7], %s572
          %s574 = sand.u32 %s145, 1
          %s575 = smul.addr %s574, 8
          %s576 = scalar_lea.vmem [#allocation8], %s575
          %577 = dma.done %s573, 128
        $region64: #{tpu_custom_call.1} parent=59 // pred_fallthru
          _
        // Predicated region
        $region65: #{tpu_custom_call.1} parent=59 // pred_check
          %p578 = pneg %p188
        $region66: #{tpu_custom_call.1} parent=59 // pred_check_branch
          %580 = sbr.rel (%p578) target = $region68
        $region67: #{tpu_custom_call.1} parent=59 // pred_region
          %s581 = sand.u32 %s173, 1
          %s582 = scalar_lea.sflag [#allocation10], %s581
          %s583 = sand.u32 %s173, 1
          %s584 = smul.addr %s583, 16
          %s585 = scalar_lea.vmem [#allocation9], %s584
          %586 = dma.done %s582, 256
        $region68: #{tpu_custom_call.1} parent=59 // pred_fallthru
          _
      $region60: #{tpu_custom_call.1} parent=5 // pred_fallthru
        _
    $region6: #{tpu_custom_call.1} parent=1 // loop_footer
      %s25 = sadd.s32 1, %s21
    $region7: #{tpu_custom_call.1} parent=1 // loop_footer_branch
      %20 = sbr.rel target = $region3
    $region8: #{tpu_custom_call.1} parent=1 // loop_exit
      _
    %587 = vsyncpa [#allocation6], 1
    %s588 = scalar_lea.sflag [#allocation6], 1
    %589 = vsyncpa %s588, 1
    %590 = vsyncpa [#allocation7], 1
    %s591 = scalar_lea.sflag [#allocation7], 1
    %592 = vsyncpa %s591, 1
    %593 = vsyncpa [#allocation10], 1
    %s594 = scalar_lea.sflag [#allocation10], 1
    %595 = vsyncpa %s594, 1

</llo_original>
